<compile_context>
chip_gen: v6e
topology: v6e:2x2x1
jax: 0.10.0
libtpu: 0.0.40
codegen_flags: <defaults>
</compile_context>

<pallas_src>
import jax
import jax.numpy as jnp
from jax.experimental import pallas as pl
from jax.experimental.pallas import tpu as pltpu


def _se1d_kernel(x_ref, mask_ref, w1t_ref, w2t_ref, o_ref):
    # Upcast to f32 for all math regardless of I/O dtype (bf16-safe path).
    x = x_ref[...].astype(jnp.float32)               # (Bblk, C, L)
    m = mask_ref[...].astype(jnp.float32)            # (Bblk, 1, L), 0/1

    # Masked "squeeze" over L, kept lane-dense as (Bblk, C).
    cnt = jnp.sum(m, axis=-1)                        # (Bblk, 1)
    cnt = jnp.where(cnt == 0.0, 1.0, cnt)            # n.masked_fill_(n == 0, 1)
    y = jnp.sum(x * m, axis=-1) / cnt                # (Bblk, C)

    # fc: Linear(C->H, no bias) -> ReLU -> Linear(H->C, no bias) -> Sigmoid
    h = jnp.dot(y, w1t_ref[...].astype(jnp.float32),
                preferred_element_type=jnp.float32)  # (Bblk, H)
    h = jnp.maximum(h, 0.0)
    s = jnp.dot(h, w2t_ref[...].astype(jnp.float32),
                preferred_element_type=jnp.float32)  # (Bblk, C)
    s = jax.nn.sigmoid(s)

    # Excitation: per-(batch, channel) rescale broadcast over L.
    o_ref[...] = (x * s[:, :, None]).astype(o_ref.dtype)


def _chip_budget():
    """Return (vmem_limit_bytes, per_block_budget_bytes, multicore?) for this chip."""
    try:
        vmem_cap = int(pltpu.get_tpu_info().vmem_capacity_bytes)
    except Exception:
        vmem_cap = 64 * 1024 * 1024  # conservative (v7x-like) fallback
    if vmem_cap >= 100 * 1024 * 1024:
        # v5e / v6e: 128 MiB VMEM, single TensorCore.
        vmem_limit = 96 * 1024 * 1024
        multicore = False
    else:
        # v7x: 64 MiB VMEM per TC, 2 TensorCores per chip.
        vmem_limit = 48 * 1024 * 1024
        multicore = True
    # ~2x double-buffered x + 2x out + temps ~= 6 live copies of one block.
    return vmem_limit, vmem_limit // 6, multicore


def squeeze_excitation_1d(x, mask, w1, w2):
    """x: (B, C, L); mask: (B, 1, L); w1: (C//r, C); w2: (C, C//r) -- PyTorch layouts."""
    B, C, L = x.shape
    H = w1.shape[0]
    assert w1.shape == (H, C) and w2.shape == (C, H)
    assert mask.shape == (B, 1, L)

    itemsize = x.dtype.itemsize
    row_bytes = C * L * itemsize
    vmem_limit, block_budget, multicore = _chip_budget()
    weight_bytes = 2 * C * H * 4

    if 6 * row_bytes + weight_bytes > vmem_limit:
        raise ValueError(
            f"SqueezeAndExcitation1d: a single (C={C}, L={L}) row "
            f"({row_bytes} B) does not fit the per-block VMEM budget "
            f"({vmem_limit} B limit); an L-chunked fallback is required."
        )

    # Batch block size from the per-block VMEM budget.
    bblk = max(1, block_budget // row_bytes)
    bblk = min(bblk, B)
    if multicore and B >= 2:
        # Both v7x TensorCores should get work: >=2 steps, and prefer an even
        # step count so neither core carries an extra block.
        bblk = min(bblk, pl.cdiv(B, 2))
        if pl.cdiv(B, bblk) % 2 == 1:
            for cand in range(bblk, 0, -1):
                if pl.cdiv(B, cand) % 2 == 0:
                    bblk = cand
                    break
    grid_b = pl.cdiv(B, bblk)   # partial last block handled by Pallas masking

    # Mask in the same dtype as x (0/1 exact in bf16 too).
    mp = mask.astype(x.dtype)

    # Pre-transpose the weights once (outside the kernel): fc layers become
    # plain row-matrix matmuls with no in-kernel transpose.
    w1t = w1.T.astype(jnp.float32)                   # (C, H)
    w2t = w2.T.astype(jnp.float32)                   # (H, C)

    cost = pl.CostEstimate(
        flops=int(3 * B * C * L + 4 * B * C * H),
        transcendentals=int(B * C),
        bytes_accessed=int(2 * B * C * L * itemsize + B * L * itemsize
                           + 2 * C * H * 4),
    )

    out = pl.pallas_call(
        _se1d_kernel,
        out_shape=jax.ShapeDtypeStruct((B, C, L), x.dtype),
        grid_spec=pltpu.PrefetchScalarGridSpec(
            num_scalar_prefetch=0,
            grid=(grid_b,),
            in_specs=[
                pl.BlockSpec((bblk, C, L), lambda b: (b, 0, 0)),  # x block
                pl.BlockSpec((bblk, 1, L), lambda b: (b, 0, 0)),  # mask block
                pl.BlockSpec((C, H), lambda b: (0, 0)),           # w1.T (resident)
                pl.BlockSpec((H, C), lambda b: (0, 0)),           # w2.T (resident)
            ],
            out_specs=pl.BlockSpec((bblk, C, L), lambda b: (b, 0, 0)),
        ),
        compiler_params=pltpu.CompilerParams(
            dimension_semantics=("parallel",),
            vmem_limit_bytes=vmem_limit,
        ),
        cost_estimate=cost,
    )(x, mp, w1t, w2t)

    return out


if __name__ == "__main__":
    B, C, L = 2, 32, 16
    reduction = 4
    H = C // reduction

    key = jax.random.PRNGKey(0)
    kx, km, k1, k2 = jax.random.split(key, 4)

    x = jax.random.normal(kx, (B, C, L), dtype=jnp.float32)
    # binary validity mask over the length axis, shape (B, 1, L)
    mask = (jax.random.uniform(km, (B, 1, L)) > 0.3).astype(jnp.float32)

    # deterministic parameter init (PyTorch Linear weight shape is (out, in))
    bound1 = 1.0 / (C ** 0.5)
    w1 = jax.random.uniform(k1, (H, C), minval=-bound1, maxval=bound1,
                            dtype=jnp.float32)
    bound2 = 1.0 / (H ** 0.5)
    w2 = jax.random.uniform(k2, (C, H), minval=-bound2, maxval=bound2,
                            dtype=jnp.float32)

    out = squeeze_excitation_1d(x, mask, w1, w2)
    out = jax.block_until_ready(out)

    # pure-JAX reference (same semantics as the PyTorch forward)
    n = jnp.sum(mask, axis=2)
    n = jnp.where(n == 0.0, 1.0, n)
    y = jnp.sum(x * mask, axis=2) / n
    y = jnp.maximum(y @ w1.T, 0.0)
    y = jax.nn.sigmoid(y @ w2.T)
    ref = x * y[:, :, None]

    assert out.shape == ref.shape
    assert jnp.allclose(out, ref, atol=1e-5, rtol=1e-5), "mismatch vs reference"

    print("KERNEL_OK")
</pallas_src>

<mosaic_0001>
module attributes {stable_mosaic.version = 11 : i64} {
  func.func @_se1d_kernel(%arg0: i32, %arg1: memref<1x32x16xf32, #tpu.memory_space<vmem>>, %arg2: memref<1x1x16xf32, #tpu.memory_space<vmem>>, %arg3: memref<32x8xf32, #tpu.memory_space<vmem>>, %arg4: memref<8x32xf32, #tpu.memory_space<vmem>>, %arg5: memref<1x32x16xf32, #tpu.memory_space<vmem>>) attributes {dimension_semantics = [#tpu.dimension_semantics<parallel>], iteration_bounds = array<i64: 2>, scalar_prefetch = 0 : i64, scratch_operands = 0 : i64, tpu.core_type = #tpu.core_type<tc>, window_params = [{transform_indices = @transform_0, window_bounds = array<i64: 1, 32, 16>}, {transform_indices = @transform_1, window_bounds = array<i64: 1, 1, 16>}, {pipeline_mode = #tpu.pipeline_mode<synchronous>, transform_indices = @transform_2, window_bounds = array<i64: 32, 8>}, {pipeline_mode = #tpu.pipeline_mode<synchronous>, transform_indices = @transform_3, window_bounds = array<i64: 8, 32>}, {transform_indices = @transform_4, window_bounds = array<i64: 1, 32, 16>}]} {
    %c0 = arith.constant 0 : index
    %c0_0 = arith.constant 0 : index
    %c0_1 = arith.constant 0 : index
    %0 = vector.load %arg1[%c0, %c0_0, %c0_1] : memref<1x32x16xf32, #tpu.memory_space<vmem>>, vector<1x32x16xf32>
    %c0_2 = arith.constant 0 : index
    %c0_3 = arith.constant 0 : index
    %c0_4 = arith.constant 0 : index
    %1 = vector.load %arg2[%c0_2, %c0_3, %c0_4] : memref<1x1x16xf32, #tpu.memory_space<vmem>>, vector<1x1x16xf32>
    %cst = arith.constant dense<0.000000e+00> : vector<1x1xf32>
    %2 = vector.multi_reduction <add>, %1, %cst [2] : vector<1x1x16xf32> to vector<1x1xf32>
    %cst_5 = arith.constant 0.000000e+00 : f32
    %3 = vector.broadcast %cst_5 : f32 to vector<1x1xf32>
    %4 = arith.cmpf oeq, %2, %3 : vector<1x1xf32>
    %cst_6 = arith.constant 1.000000e+00 : f32
    %5 = vector.broadcast %cst_6 : f32 to vector<1x1xf32>
    %6 = arith.select %4, %5, %2 : vector<1x1xi1>, vector<1x1xf32>
    %7 = vector.broadcast %1 : vector<1x1x16xf32> to vector<1x32x16xf32>
    %8 = arith.mulf %0, %7 : vector<1x32x16xf32>
    %cst_7 = arith.constant dense<0.000000e+00> : vector<1x32xf32>
    %9 = vector.multi_reduction <add>, %8, %cst_7 [2] : vector<1x32x16xf32> to vector<1x32xf32>
    %10 = vector.broadcast %6 : vector<1x1xf32> to vector<1x32xf32>
    %11 = arith.divf %9, %10 : vector<1x32xf32>
    %c0_8 = arith.constant 0 : index
    %c0_9 = arith.constant 0 : index
    %12 = vector.load %arg3[%c0_8, %c0_9] : memref<32x8xf32, #tpu.memory_space<vmem>>, vector<32x8xf32>
    %cst_10 = arith.constant dense<0.000000e+00> : vector<1x8xf32>
    %13 = tpu.matmul %11, %12, %cst_10 {dimension_numbers = #tpu.dot_dimension_numbers<[1], [0], [0], [1], [0, 0, 1, 1], [], []>} : vector<1x32xf32>, vector<32x8xf32>, vector<1x8xf32> -> vector<1x8xf32>
    %cst_11 = arith.constant 0.000000e+00 : f32
    %14 = vector.broadcast %cst_11 : f32 to vector<1x8xf32>
    %15 = arith.maximumf %13, %14 : vector<1x8xf32>
    %c0_12 = arith.constant 0 : index
    %c0_13 = arith.constant 0 : index
    %16 = vector.load %arg4[%c0_12, %c0_13] : memref<8x32xf32, #tpu.memory_space<vmem>>, vector<8x32xf32>
    %cst_14 = arith.constant dense<0.000000e+00> : vector<1x32xf32>
    %17 = tpu.matmul %15, %16, %cst_14 {dimension_numbers = #tpu.dot_dimension_numbers<[1], [0], [0], [1], [0, 0, 1, 1], [], []>} : vector<1x8xf32>, vector<8x32xf32>, vector<1x32xf32> -> vector<1x32xf32>
    %18 = arith.negf %17 : vector<1x32xf32>
    %19 = math.exp %18 : vector<1x32xf32>
    %cst_15 = arith.constant 1.000000e+00 : f32
    %20 = vector.broadcast %cst_15 : f32 to vector<1x32xf32>
    %21 = arith.addf %20, %19 : vector<1x32xf32>
    %22 = arith.divf %20, %21 : vector<1x32xf32>
    %23 = vector.shape_cast %22 : vector<1x32xf32> to vector<1x32x1xf32>
    %24 = vector.broadcast %23 : vector<1x32x1xf32> to vector<1x32x16xf32>
    %25 = arith.mulf %0, %24 : vector<1x32x16xf32>
    %c0_16 = arith.constant 0 : index
    %c0_17 = arith.constant 0 : index
    %c0_18 = arith.constant 0 : index
    %26 = vector.load %arg5[%c0_16, %c0_17, %c0_18] : memref<1x32x16xf32, #tpu.memory_space<vmem>>, vector<1x32x16xf32>
    tpu.vector_store %arg5[%c0_16, %c0_17, %c0_18], %25 {strides = array<i32>} : memref<1x32x16xf32, #tpu.memory_space<vmem>>, vector<1x32x16xf32>,
    return
  }
  func.func @transform_0(%arg0: i32) -> (i32, i32, i32) {
    %c0_i32 = arith.constant 0 : i32
    %c0_i32_0 = arith.constant 0 : i32
    %c0_i32_1 = arith.constant 0 : i32
    return %arg0, %c0_i32, %c0_i32_0 : i32, i32, i32
  }
  func.func @transform_1(%arg0: i32) -> (i32, i32, i32) {
    %c0_i32 = arith.constant 0 : i32
    %c0_i32_0 = arith.constant 0 : i32
    %c0_i32_1 = arith.constant 0 : i32
    return %arg0, %c0_i32, %c0_i32_0 : i32, i32, i32
  }
  func.func @transform_2(%arg0: i32) -> (i32, i32) {
    %c0_i32 = arith.constant 0 : i32
    %c0_i32_0 = arith.constant 0 : i32
    %c0_i32_1 = arith.constant 0 : i32
    return %c0_i32, %c0_i32_0 : i32, i32
  }
  func.func @transform_3(%arg0: i32) -> (i32, i32) {
    %c0_i32 = arith.constant 0 : i32
    %c0_i32_0 = arith.constant 0 : i32
    %c0_i32_1 = arith.constant 0 : i32
    return %c0_i32, %c0_i32_0 : i32, i32
  }
  func.func @transform_4(%arg0: i32) -> (i32, i32, i32) {
    %c0_i32 = arith.constant 0 : i32
    %c0_i32_0 = arith.constant 0 : i32
    %c0_i32_1 = arith.constant 0 : i32
    return %arg0, %c0_i32, %c0_i32_0 : i32, i32, i32
  }
}

</mosaic_0001>

<llo_original>
// kernel: tpu_custom_call.1
$region0: #{tpu_custom_call.1}
  #allocation0 [shape = 'u32[]', space=smem, size = 0x4, offset = 0x4, fixed_abs, tag = 'smem constant byte address 0x4 - core index']
  #allocation1 [shape = 'u32[144,128]{1,0:T(1,128)}', space=vmem, size = 0x12000, scoped, tag = 'internal scratch']
  %s0 = inlined_call_operand.vmem [shape: f32[2,32,16], index: 0, kind: input, shape index: {}]
  %s1 = inlined_call_operand.vmem [shape: f32[2,1,16], index: 1, kind: input, shape index: {}]
  %s2 = inlined_call_operand.vmem [shape: f32[32,8], index: 2, kind: input, shape index: {}]
  %s3 = inlined_call_operand.vmem [shape: f32[8,32], index: 3, kind: input, shape index: {}]
  %s4 = inlined_call_operand.vmem [shape: f32[2,32,16], index: 4, kind: output, shape index: {}]
  %s5 = sld [smem:[#allocation0]]
  $region49: #{tpu_custom_call.1} parent=0
    _
  %s7 = ssub.s32 1, %s5
  %s8 = scalar_select 0, %s7, %s5
  loop: start=0, step=1, limit=4
  $region2: #{tpu_custom_call.1} parent=0 // loop_pre_header
    _
  $region3: #{tpu_custom_call.1} parent=0 // loop_header
    %s10 = sphi 0, %s14
    %p11 = scmp.ge.s32.totalorder %s10, 4
    %s20 = sphi 0, %s22
    %s23 = sphi 0, %s20
    %s24 = sphi 0, %s23
    %s40 = sphi 0, %s24
    %s46 = sphi 0, %s48
    %s49 = sphi 0, %s46
    %s50 = sphi 0, %s49
    %s66 = sphi 0, %s50
    %s70 = sphi 0, %s70
    %s72 = sphi 0, %s70
    %s73 = sphi 0, %s72
    %s87 = sphi 0, %s73
    %s91 = sphi 0, %s91
    %s93 = sphi 0, %s91
    %s94 = sphi 0, %s93
    %s108 = sphi 0, %s94
    %s114 = sphi 0, %s116
    %s117 = sphi 0, %s114
    %s118 = sphi 0, %s117
    %s134 = sphi 0, %s118
  $region4: #{tpu_custom_call.1} parent=0 // loop_header_branch
    %13 = sbr.rel (%p11) target = $region8
  $region5: #{tpu_custom_call.1} parent=0 // loop_body
    %s15 = ssub.s32 %s10, 1
    %s16 = ssub.s32 %s10, 2
    %s17 = sadd.s32 %s10, 1
    %s18 = ssub.s32 %s10, %s17
    %p19 = scmp.eq.s32.totalorder %s18, 0
    %s21 = sadd.s32 %s20, 1
    %s22 = scalar_select %p19, %s20, %s21
    %p25 = pneg %p19
    %p26 = scmp.eq.s32.totalorder %s10, 1
    %p27 = por %p25, %p26
    %p28 = scmp.ne.s32.totalorder %s20, %s23
    %p29 = scmp.eq.s32.totalorder %s10, 0
    %p30 = por %p28, %p29
    %p31 = scmp.ne.s32.totalorder %s20, %s23
    %p32 = scmp.eq.s32.totalorder %s15, 1
    %p33 = por %p31, %p32
    %p34 = scmp.ne.s32.totalorder %s23, %s24
    %p35 = scmp.eq.s32.totalorder %s15, 0
    %p36 = por %p34, %p35
    %p37 = scmp.ne.s32.totalorder %s23, %s24
    %p38 = scmp.eq.s32.totalorder %s16, 1
    %p39 = por %p37, %p38
    %p41 = scmp.ne.s32.totalorder %s24, %s40
    %p42 = scmp.eq.s32.totalorder %s16, 0
    %p43 = por %p41, %p42
    %s44 = ssub.s32 %s10, %s17
    %p45 = scmp.eq.s32.totalorder %s44, 0
    %s47 = sadd.s32 %s46, 1
    %s48 = scalar_select %p45, %s46, %s47
    %p51 = pneg %p45
    %p52 = scmp.eq.s32.totalorder %s10, 1
    %p53 = por %p51, %p52
    %p54 = scmp.ne.s32.totalorder %s46, %s49
    %p55 = scmp.eq.s32.totalorder %s10, 0
    %p56 = por %p54, %p55
    %p57 = scmp.ne.s32.totalorder %s46, %s49
    %p58 = scmp.eq.s32.totalorder %s15, 1
    %p59 = por %p57, %p58
    %p60 = scmp.ne.s32.totalorder %s49, %s50
    %p61 = scmp.eq.s32.totalorder %s15, 0
    %p62 = por %p60, %p61
    %p63 = scmp.ne.s32.totalorder %s49, %s50
    %p64 = scmp.eq.s32.totalorder %s16, 1
    %p65 = por %p63, %p64
    %p67 = scmp.ne.s32.totalorder %s50, %s66
    %p68 = scmp.eq.s32.totalorder %s16, 0
    %p69 = por %p67, %p68
    %s71 = sadd.s32 %s70, 1
    %p74 = scmp.eq.s32.totalorder %s10, 1
    %p75 = scmp.ne.s32.totalorder %s70, %s72
    %p76 = scmp.eq.s32.totalorder %s10, 0
    %p77 = por %p75, %p76
    %p78 = scmp.ne.s32.totalorder %s70, %s72
    %p79 = scmp.eq.s32.totalorder %s15, 1
    %p80 = por %p78, %p79
    %p81 = scmp.ne.s32.totalorder %s72, %s73
    %p82 = scmp.eq.s32.totalorder %s15, 0
    %p83 = por %p81, %p82
    %p84 = scmp.ne.s32.totalorder %s72, %s73
    %p85 = scmp.eq.s32.totalorder %s16, 1
    %p86 = por %p84, %p85
    %p88 = scmp.ne.s32.totalorder %s73, %s87
    %p89 = scmp.eq.s32.totalorder %s16, 0
    %p90 = por %p88, %p89
    %s92 = sadd.s32 %s91, 1
    %p95 = scmp.eq.s32.totalorder %s10, 1
    %p96 = scmp.ne.s32.totalorder %s91, %s93
    %p97 = scmp.eq.s32.totalorder %s10, 0
    %p98 = por %p96, %p97
    %p99 = scmp.ne.s32.totalorder %s91, %s93
    %p100 = scmp.eq.s32.totalorder %s15, 1
    %p101 = por %p99, %p100
    %p102 = scmp.ne.s32.totalorder %s93, %s94
    %p103 = scmp.eq.s32.totalorder %s15, 0
    %p104 = por %p102, %p103
    %p105 = scmp.ne.s32.totalorder %s93, %s94
    %p106 = scmp.eq.s32.totalorder %s16, 1
    %p107 = por %p105, %p106
    %p109 = scmp.ne.s32.totalorder %s94, %s108
    %p110 = scmp.eq.s32.totalorder %s16, 0
    %p111 = por %p109, %p110
    %s112 = ssub.s32 %s10, %s17
    %p113 = scmp.eq.s32.totalorder %s112, 0
    %s115 = sadd.s32 %s114, 1
    %s116 = scalar_select %p113, %s114, %s115
    %p119 = pneg %p113
    %p120 = scmp.eq.s32.totalorder %s10, 1
    %p121 = por %p119, %p120
    %p122 = scmp.ne.s32.totalorder %s114, %s117
    %p123 = scmp.eq.s32.totalorder %s10, 0
    %p124 = por %p122, %p123
    %p125 = scmp.ne.s32.totalorder %s114, %s117
    %p126 = scmp.eq.s32.totalorder %s15, 1
    %p127 = por %p125, %p126
    %p128 = scmp.ne.s32.totalorder %s117, %s118
    %p129 = scmp.eq.s32.totalorder %s15, 0
    %p130 = por %p128, %p129
    %p131 = scmp.ne.s32.totalorder %s117, %s118
    %p132 = scmp.eq.s32.totalorder %s16, 1
    %p133 = por %p131, %p132
    %p135 = scmp.ne.s32.totalorder %s118, %s134
    %p136 = scmp.eq.s32.totalorder %s16, 0
    %p137 = por %p135, %p136
    %p138 = scmp.le.s32.totalorder 1, %s10
    %p139 = scmp.lt.s32.totalorder %s10, 3
    %p140 = pnand %p138, %p139
    %p141 = pneg %p140
    // Predicated region
    $region9: #{tpu_custom_call.1} parent=5 // pred_check
      _
    $region10: #{tpu_custom_call.1} parent=5 // pred_check_branch
      %143 = sbr.rel (%p140) target = $region12
    $region11: #{tpu_custom_call.1} parent=5 // pred_region
      %s144 = ssub.s32 %s10, 1
      // Predicated region
      $region13: #{tpu_custom_call.1} parent=11 // pred_check
        %p145 = pneg %p83
      $region14: #{tpu_custom_call.1} parent=11 // pred_check_branch
        %147 = sbr.rel (%p145) target = $region16
      $region15: #{tpu_custom_call.1} parent=11 // pred_region
        _
      $region16: #{tpu_custom_call.1} parent=11 // pred_fallthru
        _
      // Predicated region
      $region17: #{tpu_custom_call.1} parent=11 // pred_check
        %p148 = pneg %p104
      $region18: #{tpu_custom_call.1} parent=11 // pred_check_branch
        %150 = sbr.rel (%p148) target = $region20
      $region19: #{tpu_custom_call.1} parent=11 // pred_region
        _
      $region20: #{tpu_custom_call.1} parent=11 // pred_fallthru
        _
    $region12: #{tpu_custom_call.1} parent=5 // pred_fallthru
      _
    %p151 = scmp.lt.s32.totalorder %s10, 2
    // Predicated region
    $region21: #{tpu_custom_call.1} parent=5 // pred_check
      %p152 = pneg %p151
    $region22: #{tpu_custom_call.1} parent=5 // pred_check_branch
      %154 = sbr.rel (%p152) target = $region24
    $region23: #{tpu_custom_call.1} parent=5 // pred_region
      // Predicated region
      $region25: #{tpu_custom_call.1} parent=23 // pred_check
        %p155 = pneg %p30
      $region26: #{tpu_custom_call.1} parent=23 // pred_check_branch
        %157 = sbr.rel (%p155) target = $region28
      $region27: #{tpu_custom_call.1} parent=23 // pred_region
        %p158 = scmp.lt.s32.totalorder %s10, 1
        %s159 = scalar_select %p158, %s10, 1
        %s160 = smul.addr %s159, 4
        %s161 = smul.addr %s160, 8
        %s162 = scalar_lea.vmem %s0, %s161
      $region28: #{tpu_custom_call.1} parent=23 // pred_fallthru
        _
      // Predicated region
      $region29: #{tpu_custom_call.1} parent=23 // pred_check
        %p163 = pneg %p56
      $region30: #{tpu_custom_call.1} parent=23 // pred_check_branch
        %165 = sbr.rel (%p163) target = $region32
      $region31: #{tpu_custom_call.1} parent=23 // pred_region
        %p166 = scmp.lt.s32.totalorder %s10, 1
        %s167 = scalar_select %p166, %s10, 1
        %s168 = scalar_lea.vmem %s1, %s167
      $region32: #{tpu_custom_call.1} parent=23 // pred_fallthru
        _
    $region24: #{tpu_custom_call.1} parent=5 // pred_fallthru
      _
    %p169 = scmp.le.s32.totalorder 1, %s10
    %p170 = scmp.lt.s32.totalorder %s10, 3
    %p171 = pnand %p169, %p170
    %p172 = pneg %p171
    // Predicated region
    $region33: #{tpu_custom_call.1} parent=5 // pred_check
      _
    $region34: #{tpu_custom_call.1} parent=5 // pred_check_branch
      %174 = sbr.rel (%p171) target = $region36
    $region35: #{tpu_custom_call.1} parent=5 // pred_region
      %s175 = ssub.s32 %s10, 1
      %p176 = scmp.lt.s32.totalorder %s15, 1
      %s177 = scalar_select %p176, %s15, 1
      %s178 = smul.addr %s177, 4
      %s179 = smul.addr %s178, 8
      %s180 = scalar_lea.vmem %s0, %s179
      %p181 = pneg %p36
      %p182 = pneg %p33
      %p183 = scmp.lt.s32.totalorder %s15, 1
      %s184 = scalar_select %p183, %s15, 1
      %s185 = scalar_lea.vmem %s1, %s184
      %p186 = pneg %p62
      %p187 = pneg %p59
      %p188 = pneg %p83
      %p189 = pneg %p80
      %p190 = pneg %p104
      %p191 = pneg %p101
      %p192 = pneg %p130
      %p193 = pneg %p127
      %p194 = scmp.lt.s32.totalorder %s15, 1
      %s195 = scalar_select %p194, %s15, 1
      %s196 = smul.addr %s195, 4
      %s197 = smul.addr %s196, 8
      %s198 = scalar_lea.vmem %s4, %s197
      %p199 = scmp.lt.s32.totalorder %s15, 1
      %s200 = scalar_select %p199, %s15, 1
      %s201 = smul.addr %s200, 4
      %s202 = smul.addr %s201, 8
      %s203 = scalar_lea.vmem %s0, %s202
      %p204 = scmp.lt.s32.totalorder %s15, 1
      %s205 = scalar_select %p204, %s15, 1
      %s206 = scalar_lea.vmem %s1, %s205
      %p207 = scmp.lt.s32.totalorder %s15, 1
      %s208 = scalar_select %p207, %s15, 1
      %s209 = smul.addr %s208, 4
      %s210 = smul.addr %s209, 8
      %s211 = scalar_lea.vmem %s4, %s210
      %v212 = vld [vmem:[%s203] sm:$0xff]
      %v213 = vld [vmem:[%s203 + $0x8] sm:$0xff]
      %v214 = vld [vmem:[%s203 + $0x10] sm:$0xff]
      %v215 = vld [vmem:[%s203 + $0x18] sm:$0xff]
      %v216 = vld [vmem:[%s206] sm:$0x1]
      %vm217 = vcmask 122880
      %v218 = vsel %vm217, %v216, 0.0
      %219 = vadd.xlane.f32.xlu0 %v218
      %v220 = vpop.xlane.xlu0 %219
      %vm221 = vcmp.eq.f32.partialorder %v220, 0.0
      %v222 = vsel %vm221, 1.0, %v220
      %v224 = vlaneseq
      %v225 = vshrl.u32 %v224, 7
      %v226 = vsub.s32 0, %v225
      %v227 = vrot.slane %v216, %v226
      %v229 = vmul.f32 %v212, %v227
      %v230 = vmul.f32 %v213, %v227
      %v231 = vmul.f32 %v214, %v227
      %v232 = vmul.f32 %v215, %v227
      %vm233 = vcmask 130048
      %v234 = vsel %vm233, %v229, 0.0
      %235 = vadd.xlane.f32.xlu0 %v234
      %v236 = vpop.xlane.xlu0 %235
      %v237 = vsel %vm233, %v230, 0.0
      %238 = vadd.xlane.f32.xlu0 %v237
      %v239 = vpop.xlane.xlu0 %238
      %v240 = vsel %vm233, %v231, 0.0
      %241 = vadd.xlane.f32.xlu0 %v240
      %v242 = vpop.xlane.xlu0 %241
      %v243 = vsel %vm233, %v232, 0.0
      %244 = vadd.xlane.f32.xlu0 %v243
      %v245 = vpop.xlane.xlu0 %244
      %v247 = vlaneseq
      %v248 = vshrl.u32 %v247, 7
      %v249 = vsub.s32 0, %v248
      %v250 = vrot.slane %v222, %v249
      %v252 = vrcp.pop %v250
      %v253 = vmul.f32 %v236, %v252
      %v254 = vmul.f32 %v239, %v252
      %v255 = vmul.f32 %v242, %v252
      %v256 = vmul.f32 %v245, %v252
      %v257 = vld [vmem:[%s2] sm:$0xff]
      %v258 = vld [vmem:[%s2 + $0x8] sm:$0xff]
      %v259 = vld [vmem:[%s2 + $0x10] sm:$0xff]
      %v260 = vld [vmem:[%s2 + $0x18] sm:$0xff]
      %265 = vset.pattern.permute.xlu0 0
      %266 = vperm.xlu0 %265, %v253
      %v267 = vpop.permute.xlu0 %266
      %268 = vset.pattern.permute.xlu0 0
      %269 = vperm.xlu0 %268, %v254
      %v270 = vpop.permute.xlu0 %269
      %271 = vset.pattern.permute.xlu0 0
      %272 = vperm.xlu0 %271, %v255
      %v273 = vpop.permute.xlu0 %272
      %274 = vset.pattern.permute.xlu0 0
      %275 = vperm.xlu0 %274, %v256
      %v276 = vpop.permute.xlu0 %275
      %v277 = vlaneseq
      %v278 = vand.u32 %v277, 127
      %v279 = vlaneseq
      %v280 = vshrl.u32 %v279, 7
      %v281 = vsub.s32 %v278, %v280
      %v282 = vrot.slane %v267, %v281
      %v283 = vadd.s32 %v278, 4294967288
      %v284 = vlaneseq
      %v285 = vshrl.u32 %v284, 7
      %v286 = vsub.s32 %v283, %v285
      %v287 = vrot.slane %v270, %v286
      %vm288 = vcmask 130112
      %v289 = vsel %vm288, %v287, %v282
      %v290 = vadd.s32 %v278, 4294967280
      %v291 = vlaneseq
      %v292 = vshrl.u32 %v291, 7
      %v293 = vsub.s32 %v290, %v292
      %v294 = vrot.slane %v273, %v293
      %vm295 = vcmask 195712
      %v296 = vsel %vm295, %v294, %v289
      %v297 = vadd.s32 %v278, 4294967272
      %v298 = vlaneseq
      %v299 = vshrl.u32 %v298, 7
      %v300 = vsub.s32 %v297, %v299
      %v301 = vrot.slane %v276, %v300
      %vm302 = vcmask 261312
      %v303 = vsel %vm302, %v301, %v296
      %vm304 = vcmask 261120
      %v305 = vsel %vm304, %v303, 0
      %307 = vmatprep.subr.mxu0 0.0
      %308 = vmatpush1.msra.mxu0 0.0
      %309 = vmatprep.subr.mxu0 0.0
      %310 = vmatpush1.msra.mxu0 0.0
      %311 = vmatprep.subr.mxu0 0.0
      %312 = vmatpush1.msra.mxu0 0.0
      %313 = vmatprep.subr.mxu0 0.0
      %314 = vmatpush1.msra.mxu0 0.0
      %315 = vmatprep.subr.mxu0 0.0
      %316 = vmatpush1.msra.mxu0 0.0
      %317 = vmatprep.subr.mxu0 0.0
      %318 = vmatpush1.msra.mxu0 0.0
      %319 = vmatprep.subr.mxu0 0.0
      %320 = vmatpush1.msra.mxu0 0.0
      %321 = vmatprep.subr.mxu0 0.0
      %322 = vmatpush1.msra.mxu0 0.0
      %323 = vmatprep.subr.mxu0 0.0
      %324 = vmatpush1.msra.mxu0 0.0
      %325 = vmatprep.subr.mxu0 0.0
      %326 = vmatpush1.msra.mxu0 0.0
      %327 = vmatprep.subr.mxu0 0.0
      %328 = vmatpush1.msra.mxu0 0.0
      %329 = vmatprep.subr.mxu0 0.0
      %330 = vmatpush1.msra.mxu0 0.0
      %331 = vmatprep.subr.mxu0 0.0
      %332 = vmatpush1.msra.mxu0 %v260
      %333 = vmatprep.subr.mxu0 0.0
      %334 = vmatpush1.msra.mxu0 %v259
      %335 = vmatprep.subr.mxu0 0.0
      %336 = vmatpush1.msra.mxu0 %v258
      %337 = vmatprep.subr.mxu0 0.0
      %338 = vmatpush1.msra.mxu0 %v257
      %339 = vmatprep.subr.mxu0 0.0
      %340 = vmatpush2.msra.mxu0 0.0
      %341 = vmatprep.subr.mxu0 0.0
      %342 = vmatpush2.msra.mxu0 0.0
      %343 = vmatprep.subr.mxu0 0.0
      %344 = vmatpush2.msra.mxu0 0.0
      %345 = vmatprep.subr.mxu0 0.0
      %346 = vmatpush2.msra.mxu0 0.0
      %347 = vmatprep.subr.mxu0 0.0
      %348 = vmatpush2.msra.mxu0 0.0
      %349 = vmatprep.subr.mxu0 0.0
      %350 = vmatpush2.msra.mxu0 0.0
      %351 = vmatprep.subr.mxu0 0.0
      %352 = vmatpush2.msra.mxu0 0.0
      %353 = vmatprep.subr.mxu0 0.0
      %354 = vmatpush2.msra.mxu0 0.0
      %355 = vmatprep.subr.mxu0 0.0
      %356 = vmatpush2.msra.mxu0 0.0
      %357 = vmatprep.subr.mxu0 0.0
      %358 = vmatpush2.msra.mxu0 0.0
      %359 = vmatprep.subr.mxu0 0.0
      %360 = vmatpush2.msra.mxu0 0.0
      %361 = vmatprep.subr.mxu0 0.0
      %362 = vmatpush2.msra.mxu0 0.0
      %363 = vmatprep.subr.mxu0 0.0
      %364 = vmatpush2.msra.mxu0 0.0
      %365 = vmatprep.subr.mxu0 0.0
      %366 = vmatpush2.msra.mxu0 0.0
      %367 = vmatprep.subr.mxu0 0.0
      %368 = vmatpush2.msra.mxu0 0.0
      %369 = vmatprep.subr.mxu0 0.0
      %370 = vmatpush2.msra.mxu0 0.0
      %371 = vmatprep.mubr.f32.mxu0 0.0
      %372 = vmatmul.mubr.f32.gmra.mxu0 %v305
      %v373 = vpop.f32.mrf.mxu0
      %v374 = vadd.f32 0.0, %v373
      %v375 = vpop.f32.mrf.mxu0
      %376 = vdwg.mxu0
      %v377 = vmax.f32 %v374, 0.0
      %v378 = vld [vmem:[%s3] sm:$0xff]
      %vm379 = vcmask 64512
      %v381 = vsel %vm379, %v377, 0
      %383 = vmatprep.subr.mxu0 0.0
      %384 = vmatpush1.msra.mxu0 0.0
      %385 = vmatprep.subr.mxu0 0.0
      %386 = vmatpush1.msra.mxu0 0.0
      %387 = vmatprep.subr.mxu0 0.0
      %388 = vmatpush1.msra.mxu0 0.0
      %389 = vmatprep.subr.mxu0 0.0
      %390 = vmatpush1.msra.mxu0 0.0
      %391 = vmatprep.subr.mxu0 0.0
      %392 = vmatpush1.msra.mxu0 0.0
      %393 = vmatprep.subr.mxu0 0.0
      %394 = vmatpush1.msra.mxu0 0.0
      %395 = vmatprep.subr.mxu0 0.0
      %396 = vmatpush1.msra.mxu0 0.0
      %397 = vmatprep.subr.mxu0 0.0
      %398 = vmatpush1.msra.mxu0 0.0
      %399 = vmatprep.subr.mxu0 0.0
      %400 = vmatpush1.msra.mxu0 0.0
      %401 = vmatprep.subr.mxu0 0.0
      %402 = vmatpush1.msra.mxu0 0.0
      %403 = vmatprep.subr.mxu0 0.0
      %404 = vmatpush1.msra.mxu0 0.0
      %405 = vmatprep.subr.mxu0 0.0
      %406 = vmatpush1.msra.mxu0 0.0
      %407 = vmatprep.subr.mxu0 0.0
      %408 = vmatpush1.msra.mxu0 0.0
      %409 = vmatprep.subr.mxu0 0.0
      %410 = vmatpush1.msra.mxu0 0.0
      %411 = vmatprep.subr.mxu0 0.0
      %412 = vmatpush1.msra.mxu0 0.0
      %413 = vmatprep.subr.mxu0 0.0
      %414 = vmatpush1.msra.mxu0 %v378
      %415 = vmatprep.subr.mxu0 0.0
      %416 = vmatpush2.msra.mxu0 0.0
      %417 = vmatprep.subr.mxu0 0.0
      %418 = vmatpush2.msra.mxu0 0.0
      %419 = vmatprep.subr.mxu0 0.0
      %420 = vmatpush2.msra.mxu0 0.0
      %421 = vmatprep.subr.mxu0 0.0
      %422 = vmatpush2.msra.mxu0 0.0
      %423 = vmatprep.subr.mxu0 0.0
      %424 = vmatpush2.msra.mxu0 0.0
      %425 = vmatprep.subr.mxu0 0.0
      %426 = vmatpush2.msra.mxu0 0.0
      %427 = vmatprep.subr.mxu0 0.0
      %428 = vmatpush2.msra.mxu0 0.0
      %429 = vmatprep.subr.mxu0 0.0
      %430 = vmatpush2.msra.mxu0 0.0
      %431 = vmatprep.subr.mxu0 0.0
      %432 = vmatpush2.msra.mxu0 0.0
      %433 = vmatprep.subr.mxu0 0.0
      %434 = vmatpush2.msra.mxu0 0.0
      %435 = vmatprep.subr.mxu0 0.0
      %436 = vmatpush2.msra.mxu0 0.0
      %437 = vmatprep.subr.mxu0 0.0
      %438 = vmatpush2.msra.mxu0 0.0
      %439 = vmatprep.subr.mxu0 0.0
      %440 = vmatpush2.msra.mxu0 0.0
      %441 = vmatprep.subr.mxu0 0.0
      %442 = vmatpush2.msra.mxu0 0.0
      %443 = vmatprep.subr.mxu0 0.0
      %444 = vmatpush2.msra.mxu0 0.0
      %445 = vmatprep.subr.mxu0 0.0
      %446 = vmatpush2.msra.mxu0 0.0
      %447 = vmatprep.mubr.f32.mxu0 0.0
      %448 = vmatmul.mubr.f32.gmra.mxu0 %v381
      %v449 = vpop.f32.mrf.mxu0
      %v450 = vadd.f32 0.0, %v449
      %v451 = vpop.f32.mrf.mxu0
      %452 = vdwg.mxu0
      %v453 = vxor.u32 %v450, 2147483648
      %v454 = vmul.f32 %v453, 1.442695
      %v455 = vpow.pop %v454
      %v456 = vadd.f32 %v455, 1.0
      %v457 = vrcp.pop %v456
      %v458 = vmul.f32 1.0, %v457
      %v459 = vlaneseq
      %v460 = vshrl.u32 %v459, 7
      %v461 = vsub.s32 0, %v460
      %v462 = vrot.slane %v458, %v461
      %464 = vbcast.lane.b32.xlu0 %v462, 256
      %v465 = vpop.permute.xlu0 %464
      %s467 = sor.u32 256, 8
      %468 = vbcast.lane.b32.xlu0 %v462, %s467
      %v469 = vpop.permute.xlu0 %468
      %s471 = sor.u32 256, 16
      %472 = vbcast.lane.b32.xlu0 %v462, %s471
      %v473 = vpop.permute.xlu0 %472
      %s475 = sor.u32 256, 24
      %476 = vbcast.lane.b32.xlu0 %v462, %s475
      %v477 = vpop.permute.xlu0 %476
      %v478 = vmul.f32 %v212, %v465
      %v479 = vmul.f32 %v213, %v469
      %v480 = vmul.f32 %v214, %v473
      %v481 = vmul.f32 %v215, %v477
      %482 = vst.msk [vmem:[%s211] sm:$0xff] %vm233, %v478
      %483 = vst.msk [vmem:[%s211 + $0x8] sm:$0xff] %vm233, %v479
      %484 = vst.msk [vmem:[%s211 + $0x10] sm:$0xff] %vm233, %v480
      %485 = vst.msk [vmem:[%s211 + $0x18] sm:$0xff] %vm233, %v481
      %p486 = scmp.lt.s32.totalorder %s15, 1
      %s487 = scalar_select %p486, %s15, 1
      %s488 = smul.addr %s487, 4
      %s489 = smul.addr %s488, 8
      %s490 = scalar_lea.vmem %s4, %s489
      // Predicated region
      $region37: #{tpu_custom_call.1} parent=35 // pred_check
        %p491 = pneg %p127
      $region38: #{tpu_custom_call.1} parent=35 // pred_check_branch
        %493 = sbr.rel (%p491) target = $region40
      $region39: #{tpu_custom_call.1} parent=35 // pred_region
        _
      $region40: #{tpu_custom_call.1} parent=35 // pred_fallthru
        _
    $region36: #{tpu_custom_call.1} parent=5 // pred_fallthru
      _
    %p494 = scmp.le.s32.totalorder 2, %s10
    // Predicated region
    $region41: #{tpu_custom_call.1} parent=5 // pred_check
      %p495 = pneg %p494
    $region42: #{tpu_custom_call.1} parent=5 // pred_check_branch
      %497 = sbr.rel (%p495) target = $region44
    $region43: #{tpu_custom_call.1} parent=5 // pred_region
      %s498 = ssub.s32 %s10, 2
      // Predicated region
      $region45: #{tpu_custom_call.1} parent=43 // pred_check
        %p499 = pneg %p133
      $region46: #{tpu_custom_call.1} parent=43 // pred_check_branch
        %501 = sbr.rel (%p499) target = $region48
      $region47: #{tpu_custom_call.1} parent=43 // pred_region
        %p502 = scmp.lt.s32.totalorder %s16, 1
        %s503 = scalar_select %p502, %s16, 1
        %s504 = smul.addr %s503, 4
        %s505 = smul.addr %s504, 8
        %s506 = scalar_lea.vmem %s4, %s505
      $region48: #{tpu_custom_call.1} parent=43 // pred_fallthru
        _
    $region44: #{tpu_custom_call.1} parent=5 // pred_fallthru
      _
  $region6: #{tpu_custom_call.1} parent=0 // loop_footer
    %s14 = sadd.s32 1, %s10
  $region7: #{tpu_custom_call.1} parent=0 // loop_footer_branch
    %9 = sbr.rel target = $region3
  $region8: #{tpu_custom_call.1} parent=0 // loop_exit
    _

</llo_original>
